<compile_context>
chip_gen: v6e
topology: v6e:2x2x1
jax: 0.10.0
libtpu: 0.0.40
codegen_flags: <defaults>
</compile_context>

<pallas_src>
import functools
import math

import jax
import jax.numpy as jnp
from jax.experimental import pallas as pl
from jax.experimental.pallas import tpu as pltpu


def attn_head_kernel(x_ref, wq_ref, wk_ref, wv_ref, o_ref, *, sm_scale):
    # x_ref: (S, D); wq/wk/wv_ref: (D, H); o_ref: (S, H)
    x = x_ref[...]
    q = jnp.dot(x, wq_ref[...], preferred_element_type=jnp.float32)  # (S, H)
    k = jnp.dot(x, wk_ref[...], preferred_element_type=jnp.float32)  # (S, H)
    v = jnp.dot(x, wv_ref[...], preferred_element_type=jnp.float32)  # (S, H)

    # scores = q @ k^T / sqrt(H)   (contract last dims of both -> MXU)
    s = jax.lax.dot_general(
        q, k, (((1,), (1,)), ((), ())), preferred_element_type=jnp.float32
    ) * sm_scale                                                      # (S, S)

    # Causal additive mask: 0 on/below diagonal, -1e10 above (matches buffer).
    seq = s.shape[0]
    row = jax.lax.broadcasted_iota(jnp.int32, (seq, seq), 0)
    col = jax.lax.broadcasted_iota(jnp.int32, (seq, seq), 1)
    s = s + jnp.where(col <= row, jnp.float32(0.0), jnp.float32(-1e10))

    # Numerically stable softmax along keys.
    m = jnp.max(s, axis=-1, keepdims=True)
    p = jnp.exp(s - m)
    l = jnp.sum(p, axis=-1, keepdims=True)
    attn = p / l

    o = jnp.dot(attn, v, preferred_element_type=jnp.float32)         # (S, H)
    o_ref[...] = o.astype(o_ref.dtype)


def out_proj_kernel(xt_ref, w_ref, o_ref):
    # xt_ref: (S, D) — heads-concat output already transposed to (seq, d_model)
    # w_ref : (N*H, D) — W_out flattened over (n, h)
    # einsum 'bds,nhd->bsd' == per-channel scale by sum_{n,h} W_out[n,h,d].
    w_sum = jnp.sum(w_ref[...], axis=0, keepdims=True)               # (1, D)
    o_ref[...] = (xt_ref[...] * w_sum).astype(o_ref.dtype)


def attention_forward(x, w_qkv, w_out):
    """x: (B, S, D); w_qkv: (N, D, 3H); w_out: (N, H, D)  ->  (B, S, D)."""
    batch, seq, d_model = x.shape
    n_heads, d_model_w, three_h = w_qkv.shape
    head_dim = three_h // 3
    assert d_model_w == d_model and n_heads * head_dim == d_model

    # torch.chunk(qkv, 3, dim=-1) == contracting against these weight slices.
    w_q = w_qkv[:, :, :head_dim]            # (N, D, H)
    w_k = w_qkv[:, :, head_dim:2 * head_dim]
    w_v = w_qkv[:, :, 2 * head_dim:]

    cost = pl.CostEstimate(
        flops=2 * batch * n_heads * seq * d_model * 3 * head_dim
        + 4 * batch * n_heads * seq * seq * head_dim,
        transcendentals=batch * n_heads * seq * seq,
        bytes_accessed=4 * (batch * seq * d_model
                            + batch * 3 * n_heads * d_model * head_dim
                            + batch * n_heads * seq * head_dim),
    )

    # Kernel 1: fused per-(batch, head) QKV projection + causal attention.
    attn_out = pl.pallas_call(
        functools.partial(attn_head_kernel, sm_scale=1.0 / math.sqrt(head_dim)),
        out_shape=jax.ShapeDtypeStruct((batch, n_heads, seq, head_dim), x.dtype),
        grid_spec=pltpu.PrefetchScalarGridSpec(
            num_scalar_prefetch=0,
            grid=(batch, n_heads),          # heads innermost -> x stays resident
            in_specs=[
                pl.BlockSpec((None, seq, d_model), lambda b, n: (b, 0, 0)),
                pl.BlockSpec((None, d_model, head_dim), lambda b, n: (n, 0, 0)),
                pl.BlockSpec((None, d_model, head_dim), lambda b, n: (n, 0, 0)),
                pl.BlockSpec((None, d_model, head_dim), lambda b, n: (n, 0, 0)),
            ],
            out_specs=pl.BlockSpec(
                (None, None, seq, head_dim), lambda b, n: (b, n, 0, 0)
            ),
        ),
        compiler_params=pltpu.CompilerParams(
            dimension_semantics=("parallel", "parallel")
        ),
        cost_estimate=cost,
    )(x, w_q, w_k, w_v)

    # Zero-FLOP layout plumbing matching the module exactly:
    #   out.reshape(b, -1, s) and the transpose implied by 'bds,...->bsd'.
    out_r = attn_out.reshape(batch, n_heads * head_dim, seq)   # (B, D, S)
    out_t = jnp.swapaxes(out_r, 1, 2)                          # (B, S, D)
    w_flat = w_out.reshape(n_heads * head_dim, d_model)        # (N*H, D)

    # Kernel 2: final projection einsum 'bds,nhd->bsd' (reduce W_out + scale).
    y = pl.pallas_call(
        out_proj_kernel,
        out_shape=jax.ShapeDtypeStruct((batch, seq, d_model), x.dtype),
        grid_spec=pltpu.PrefetchScalarGridSpec(
            num_scalar_prefetch=0,
            grid=(batch,),
            in_specs=[
                pl.BlockSpec((None, seq, d_model), lambda b: (b, 0, 0)),
                pl.BlockSpec((n_heads * head_dim, d_model), lambda b: (0, 0)),
            ],
            out_specs=pl.BlockSpec((None, seq, d_model), lambda b: (b, 0, 0)),
        ),
        compiler_params=pltpu.CompilerParams(dimension_semantics=("parallel",)),
    )(out_t, w_flat)
    return y


def attention_reference(x, w_qkv, w_out, head_dim):
    """Pure-JAX transcription of the PyTorch module (precision=highest)."""
    qkv = jnp.einsum('bsd,ndh->bnsh', x, w_qkv, precision='highest')
    q, k, v = jnp.split(qkv, 3, axis=-1)
    attn = jnp.einsum('bnqh,bnkh->bnqk', q, k, precision='highest') / math.sqrt(head_dim)
    s = x.shape[1]
    mask = -1e10 * (1.0 - jnp.tril(jnp.ones((s, s), jnp.float32)))
    attn = attn + mask
    attn = jax.nn.softmax(attn, axis=-1)
    out = jnp.einsum('bnqk,bnkh->bnqh', attn, v, precision='highest')
    out = out.reshape(out.shape[0], -1, out.shape[-2])
    return jnp.einsum('bds,nhd->bsd', out, w_out, precision='highest')


if __name__ == "__main__":
    # Small shapes consistent with the module.
    batch, seq, d_model, n_heads, max_seq_len = 2, 8, 32, 4, 16
    head_dim = d_model // n_heads
    init_scale = 1.0
    assert seq <= max_seq_len

    key = jax.random.PRNGKey(0)
    kx, kq, ko = jax.random.split(key, 3)

    # Mirrors torch.randn(...)/sqrt(d_model)*init_scale initialization.
    w_qkv = (jax.random.normal(kq, (n_heads, d_model, 3 * head_dim), jnp.float32)
             / math.sqrt(d_model) * init_scale)
    w_out = (jax.random.normal(ko, (n_heads, head_dim, d_model), jnp.float32)
             / math.sqrt(d_model) * init_scale)
    x = jax.random.normal(kx, (batch, seq, d_model), jnp.float32)

    y = attention_forward(x, w_qkv, w_out)
    y = jax.block_until_ready(y)

    ref = attention_reference(x, w_qkv, w_out, head_dim)
    assert y.shape == (batch, seq, d_model)
    max_err = float(jnp.max(jnp.abs(y - ref)))
    assert jnp.allclose(y, ref, atol=1e-3, rtol=1e-3), f"max abs err {max_err}"

    print("KERNEL_OK")
</pallas_src>

<mosaic_0001>
module attributes {stable_mosaic.version = 11 : i64} {
  func.func @attn_head_kernel(%arg0: i32, %arg1: i32, %arg2: memref<1x8x32xf32, #tpu.memory_space<vmem>>, %arg3: memref<1x32x8xf32, #tpu.memory_space<vmem>>, %arg4: memref<1x32x8xf32, #tpu.memory_space<vmem>>, %arg5: memref<1x32x8xf32, #tpu.memory_space<vmem>>, %arg6: memref<1x1x8x8xf32, #tpu.memory_space<vmem>>) attributes {dimension_semantics = [#tpu.dimension_semantics<parallel>, #tpu.dimension_semantics<parallel>], iteration_bounds = array<i64: 2, 4>, scalar_prefetch = 0 : i64, scratch_operands = 0 : i64, tpu.core_type = #tpu.core_type<tc>, window_params = [{transform_indices = @transform_0, window_bounds = array<i64: 1, 8, 32>}, {transform_indices = @transform_1, window_bounds = array<i64: 1, 32, 8>}, {transform_indices = @transform_2, window_bounds = array<i64: 1, 32, 8>}, {transform_indices = @transform_3, window_bounds = array<i64: 1, 32, 8>}, {transform_indices = @transform_4, window_bounds = array<i64: 1, 1, 8, 8>}]} {
    %c0 = arith.constant 0 : index
    %c0_0 = arith.constant 0 : index
    %c0_1 = arith.constant 0 : index
    %0 = vector.load %arg2[%c0, %c0_0, %c0_1] : memref<1x8x32xf32, #tpu.memory_space<vmem>>, vector<1x8x32xf32>
    %1 = vector.shape_cast %0 : vector<1x8x32xf32> to vector<8x32xf32>
    %c0_2 = arith.constant 0 : index
    %c0_3 = arith.constant 0 : index
    %c0_4 = arith.constant 0 : index
    %2 = vector.load %arg3[%c0_2, %c0_3, %c0_4] : memref<1x32x8xf32, #tpu.memory_space<vmem>>, vector<1x32x8xf32>
    %3 = vector.shape_cast %2 : vector<1x32x8xf32> to vector<32x8xf32>
    %cst = arith.constant dense<0.000000e+00> : vector<8x8xf32>
    %4 = tpu.matmul %1, %3, %cst {dimension_numbers = #tpu.dot_dimension_numbers<[1], [0], [0], [1], [0, 0, 1, 1], [], []>} : vector<8x32xf32>, vector<32x8xf32>, vector<8x8xf32> -> vector<8x8xf32>
    %c0_5 = arith.constant 0 : index
    %c0_6 = arith.constant 0 : index
    %c0_7 = arith.constant 0 : index
    %5 = vector.load %arg4[%c0_5, %c0_6, %c0_7] : memref<1x32x8xf32, #tpu.memory_space<vmem>>, vector<1x32x8xf32>
    %6 = vector.shape_cast %5 : vector<1x32x8xf32> to vector<32x8xf32>
    %cst_8 = arith.constant dense<0.000000e+00> : vector<8x8xf32>
    %7 = tpu.matmul %1, %6, %cst_8 {dimension_numbers = #tpu.dot_dimension_numbers<[1], [0], [0], [1], [0, 0, 1, 1], [], []>} : vector<8x32xf32>, vector<32x8xf32>, vector<8x8xf32> -> vector<8x8xf32>
    %c0_9 = arith.constant 0 : index
    %c0_10 = arith.constant 0 : index
    %c0_11 = arith.constant 0 : index
    %8 = vector.load %arg5[%c0_9, %c0_10, %c0_11] : memref<1x32x8xf32, #tpu.memory_space<vmem>>, vector<1x32x8xf32>
    %9 = vector.shape_cast %8 : vector<1x32x8xf32> to vector<32x8xf32>
    %cst_12 = arith.constant dense<0.000000e+00> : vector<8x8xf32>
    %10 = tpu.matmul %1, %9, %cst_12 {dimension_numbers = #tpu.dot_dimension_numbers<[1], [0], [0], [1], [0, 0, 1, 1], [], []>} : vector<8x32xf32>, vector<32x8xf32>, vector<8x8xf32> -> vector<8x8xf32>
    %cst_13 = arith.constant dense<0.000000e+00> : vector<8x8xf32>
    %11 = tpu.matmul %4, %7, %cst_13 {dimension_numbers = #tpu.dot_dimension_numbers<[1], [1], [0], [0], [0, 0, 1, 0], [], []>} : vector<8x8xf32>, vector<8x8xf32>, vector<8x8xf32> -> vector<8x8xf32>
    %cst_14 = arith.constant 0.353553385 : f32
    %12 = vector.broadcast %cst_14 : f32 to vector<8x8xf32>
    %13 = arith.mulf %11, %12 : vector<8x8xf32>
    %14 = tpu.iota {dimensions = array<i32: 0>} : vector<8x8xi32>
    %15 = tpu.iota {dimensions = array<i32: 1>} : vector<8x8xi32>
    %16 = arith.cmpi sle, %15, %14 : vector<8x8xi32>
    %cst_15 = arith.constant 0.000000e+00 : f32
    %cst_16 = arith.constant -1.000000e+10 : f32
    %17 = vector.broadcast %cst_15 : f32 to vector<8x8xf32>
    %18 = vector.broadcast %cst_16 : f32 to vector<8x8xf32>
    %19 = arith.select %16, %17, %18 : vector<8x8xi1>, vector<8x8xf32>
    %20 = arith.addf %13, %19 : vector<8x8xf32>
    %cst_17 = arith.constant dense<0xFF800000> : vector<8xf32>
    %21 = vector.multi_reduction <maximumf>, %20, %cst_17 [1] : vector<8x8xf32> to vector<8xf32>
    %22 = vector.shape_cast %21 : vector<8xf32> to vector<8x1xf32>
    %23 = vector.broadcast %22 : vector<8x1xf32> to vector<8x8xf32>
    %24 = arith.subf %20, %23 : vector<8x8xf32>
    %25 = math.exp %24 : vector<8x8xf32>
    %cst_18 = arith.constant dense<0.000000e+00> : vector<8xf32>
    %26 = vector.multi_reduction <add>, %25, %cst_18 [1] : vector<8x8xf32> to vector<8xf32>
    %27 = vector.shape_cast %26 : vector<8xf32> to vector<8x1xf32>
    %28 = vector.broadcast %27 : vector<8x1xf32> to vector<8x8xf32>
    %29 = arith.divf %25, %28 : vector<8x8xf32>
    %cst_19 = arith.constant dense<0.000000e+00> : vector<8x8xf32>
    %30 = tpu.matmul %29, %10, %cst_19 {dimension_numbers = #tpu.dot_dimension_numbers<[1], [0], [0], [1], [0, 0, 1, 1], [], []>} : vector<8x8xf32>, vector<8x8xf32>, vector<8x8xf32> -> vector<8x8xf32>
    %c0_20 = arith.constant 0 : index
    %c0_21 = arith.constant 0 : index
    %c0_22 = arith.constant 0 : index
    %c0_23 = arith.constant 0 : index
    %31 = vector.load %arg6[%c0_20, %c0_21, %c0_22, %c0_23] : memref<1x1x8x8xf32, #tpu.memory_space<vmem>>, vector<1x1x8x8xf32>
    %32 = vector.shape_cast %31 : vector<1x1x8x8xf32> to vector<8x8xf32>
    %33 = vector.shape_cast %30 : vector<8x8xf32> to vector<1x1x8x8xf32>
    tpu.vector_store %arg6[%c0_20, %c0_21, %c0_22, %c0_23], %33 {strides = array<i32>} : memref<1x1x8x8xf32, #tpu.memory_space<vmem>>, vector<1x1x8x8xf32>,
    return
  }
  func.func @transform_0(%arg0: i32, %arg1: i32) -> (i32, i32, i32) {
    %c0_i32 = arith.constant 0 : i32
    %c0_i32_0 = arith.constant 0 : i32
    %c0_i32_1 = arith.constant 0 : i32
    return %arg0, %c0_i32, %c0_i32_0 : i32, i32, i32
  }
  func.func @transform_1(%arg0: i32, %arg1: i32) -> (i32, i32, i32) {
    %c0_i32 = arith.constant 0 : i32
    %c0_i32_0 = arith.constant 0 : i32
    %c0_i32_1 = arith.constant 0 : i32
    return %arg1, %c0_i32, %c0_i32_0 : i32, i32, i32
  }
  func.func @transform_2(%arg0: i32, %arg1: i32) -> (i32, i32, i32) {
    %c0_i32 = arith.constant 0 : i32
    %c0_i32_0 = arith.constant 0 : i32
    %c0_i32_1 = arith.constant 0 : i32
    return %arg1, %c0_i32, %c0_i32_0 : i32, i32, i32
  }
  func.func @transform_3(%arg0: i32, %arg1: i32) -> (i32, i32, i32) {
    %c0_i32 = arith.constant 0 : i32
    %c0_i32_0 = arith.constant 0 : i32
    %c0_i32_1 = arith.constant 0 : i32
    return %arg1, %c0_i32, %c0_i32_0 : i32, i32, i32
  }
  func.func @transform_4(%arg0: i32, %arg1: i32) -> (i32, i32, i32, i32) {
    %c0_i32 = arith.constant 0 : i32
    %c0_i32_0 = arith.constant 0 : i32
    %c0_i32_1 = arith.constant 0 : i32
    return %arg0, %arg1, %c0_i32, %c0_i32_0 : i32, i32, i32, i32
  }
}

</mosaic_0001>

<llo_original>
// kernel: tpu_custom_call.1
$region0: #{tpu_custom_call.1}
  #allocation0 [shape = 'u32[]', space=smem, size = 0x4, offset = 0x4, fixed_abs, tag = 'smem constant byte address 0x4 - core index']
  #allocation1 [shape = 'u32[144,128]{1,0:T(1,128)}', space=vmem, size = 0x12000, scoped, tag = 'internal scratch']
  %s0 = inlined_call_operand.vmem [shape: f32[2,8,32], index: 0, kind: input, shape index: {}]
  %s1 = inlined_call_operand.vmem [shape: f32[4,32,8], index: 1, kind: input, shape index: {}]
  %s2 = inlined_call_operand.vmem [shape: f32[4,32,8], index: 2, kind: input, shape index: {}]
  %s3 = inlined_call_operand.vmem [shape: f32[4,32,8], index: 3, kind: input, shape index: {}]
  %s4 = inlined_call_operand.hbm [shape: f32[2,4,8,8], index: 4, kind: output, shape index: {}]
  %s5 = sld [smem:[#allocation0]]
  $region49: #{tpu_custom_call.1} parent=0
    _
  %s7 = ssub.s32 1, %s5
  %s8 = scalar_select 0, %s7, %s5
  $region1: #{tpu_custom_call.1} parent=0
    #allocation2 [shape = 'u8[8192]{0}', space=vmem, size = 0x2000, scoped, tag = 'output window, operand 0']
    #allocation3 [shape = 's32[2]{0}', space=sflag, size = 0x8, scoped, tag = 'scoped memory for tpu_custom_call.1']
    %9 = vsyncpa [#allocation3], 0
    %s10 = scalar_lea.sflag [#allocation3], 1
    %11 = vsyncpa %s10, 0
    loop: start=0, step=1, limit=10
    $region2: #{tpu_custom_call.1} parent=1 // loop_pre_header
      _
    $region3: #{tpu_custom_call.1} parent=1 // loop_header
      %s13 = sphi 0, %s17
      %p14 = scmp.ge.s32.totalorder %s13, 10
      %s20 = sphi 0, %s32
      %s21 = sphi 0, %s28
      %s22 = sphi 0, %s20
      %s23 = sphi 0, %s21
      %s24 = sphi 0, %s22
      %s25 = sphi 0, %s23
      %s35 = sphi 0, %s37
      %s38 = sphi 0, %s35
      %s39 = sphi 0, %s38
      %s55 = sphi 0, %s39
      %s61 = sphi 0, %s63
      %s64 = sphi 0, %s61
      %s65 = sphi 0, %s64
      %s81 = sphi 0, %s65
      %s87 = sphi 0, %s89
      %s90 = sphi 0, %s87
      %s91 = sphi 0, %s90
      %s107 = sphi 0, %s91
      %s113 = sphi 0, %s115
      %s116 = sphi 0, %s113
      %s117 = sphi 0, %s116
      %s133 = sphi 0, %s117
      %s141 = sphi 0, %s143
      %s144 = sphi 0, %s141
      %s145 = sphi 0, %s144
      %s161 = sphi 0, %s145
    $region4: #{tpu_custom_call.1} parent=1 // loop_header_branch
      %16 = sbr.rel (%p14) target = $region8
    $region5: #{tpu_custom_call.1} parent=1 // loop_body
      %s18 = ssub.s32 %s13, 1
      %s19 = ssub.s32 %s13, 2
      %s26 = sadd.s32 1, %s21
      %p27 = scmp.ge.s32.totalorder %s26, 4
      %s28 = scalar_select %p27, 0, %s26
      %s29 = sadd.s32 1, %s20
      %s30 = scalar_select %p27, %s29, %s20
      %p31 = scmp.ge.s32.totalorder %s30, 2
      %s32 = scalar_select %p31, 0, %s30
      %s33 = ssub.s32 %s20, %s32
      %p34 = scmp.eq.s32.totalorder %s33, 0
      %s36 = sadd.s32 %s35, 1
      %s37 = scalar_select %p34, %s35, %s36
      %p40 = pneg %p34
      %p41 = scmp.eq.s32.totalorder %s13, 7
      %p42 = por %p40, %p41
      %p43 = scmp.ne.s32.totalorder %s35, %s38
      %p44 = scmp.eq.s32.totalorder %s13, 0
      %p45 = por %p43, %p44
      %p46 = scmp.ne.s32.totalorder %s35, %s38
      %p47 = scmp.eq.s32.totalorder %s18, 7
      %p48 = por %p46, %p47
      %p49 = scmp.ne.s32.totalorder %s38, %s39
      %p50 = scmp.eq.s32.totalorder %s18, 0
      %p51 = por %p49, %p50
      %p52 = scmp.ne.s32.totalorder %s38, %s39
      %p53 = scmp.eq.s32.totalorder %s19, 7
      %p54 = por %p52, %p53
      %p56 = scmp.ne.s32.totalorder %s39, %s55
      %p57 = scmp.eq.s32.totalorder %s19, 0
      %p58 = por %p56, %p57
      %s59 = ssub.s32 %s21, %s28
      %p60 = scmp.eq.s32.totalorder %s59, 0
      %s62 = sadd.s32 %s61, 1
      %s63 = scalar_select %p60, %s61, %s62
      %p66 = pneg %p60
      %p67 = scmp.eq.s32.totalorder %s13, 7
      %p68 = por %p66, %p67
      %p69 = scmp.ne.s32.totalorder %s61, %s64
      %p70 = scmp.eq.s32.totalorder %s13, 0
      %p71 = por %p69, %p70
      %p72 = scmp.ne.s32.totalorder %s61, %s64
      %p73 = scmp.eq.s32.totalorder %s18, 7
      %p74 = por %p72, %p73
      %p75 = scmp.ne.s32.totalorder %s64, %s65
      %p76 = scmp.eq.s32.totalorder %s18, 0
      %p77 = por %p75, %p76
      %p78 = scmp.ne.s32.totalorder %s64, %s65
      %p79 = scmp.eq.s32.totalorder %s19, 7
      %p80 = por %p78, %p79
      %p82 = scmp.ne.s32.totalorder %s65, %s81
      %p83 = scmp.eq.s32.totalorder %s19, 0
      %p84 = por %p82, %p83
      %s85 = ssub.s32 %s21, %s28
      %p86 = scmp.eq.s32.totalorder %s85, 0
      %s88 = sadd.s32 %s87, 1
      %s89 = scalar_select %p86, %s87, %s88
      %p92 = pneg %p86
      %p93 = scmp.eq.s32.totalorder %s13, 7
      %p94 = por %p92, %p93
      %p95 = scmp.ne.s32.totalorder %s87, %s90
      %p96 = scmp.eq.s32.totalorder %s13, 0
      %p97 = por %p95, %p96
      %p98 = scmp.ne.s32.totalorder %s87, %s90
      %p99 = scmp.eq.s32.totalorder %s18, 7
      %p100 = por %p98, %p99
      %p101 = scmp.ne.s32.totalorder %s90, %s91
      %p102 = scmp.eq.s32.totalorder %s18, 0
      %p103 = por %p101, %p102
      %p104 = scmp.ne.s32.totalorder %s90, %s91
      %p105 = scmp.eq.s32.totalorder %s19, 7
      %p106 = por %p104, %p105
      %p108 = scmp.ne.s32.totalorder %s91, %s107
      %p109 = scmp.eq.s32.totalorder %s19, 0
      %p110 = por %p108, %p109
      %s111 = ssub.s32 %s21, %s28
      %p112 = scmp.eq.s32.totalorder %s111, 0
      %s114 = sadd.s32 %s113, 1
      %s115 = scalar_select %p112, %s113, %s114
      %p118 = pneg %p112
      %p119 = scmp.eq.s32.totalorder %s13, 7
      %p120 = por %p118, %p119
      %p121 = scmp.ne.s32.totalorder %s113, %s116
      %p122 = scmp.eq.s32.totalorder %s13, 0
      %p123 = por %p121, %p122
      %p124 = scmp.ne.s32.totalorder %s113, %s116
      %p125 = scmp.eq.s32.totalorder %s18, 7
      %p126 = por %p124, %p125
      %p127 = scmp.ne.s32.totalorder %s116, %s117
      %p128 = scmp.eq.s32.totalorder %s18, 0
      %p129 = por %p127, %p128
      %p130 = scmp.ne.s32.totalorder %s116, %s117
      %p131 = scmp.eq.s32.totalorder %s19, 7
      %p132 = por %p130, %p131
      %p134 = scmp.ne.s32.totalorder %s117, %s133
      %p135 = scmp.eq.s32.totalorder %s19, 0
      %p136 = por %p134, %p135
      %s137 = ssub.s32 %s20, %s32
      %s138 = ssub.s32 %s21, %s28
      %s139 = sor.u32 %s137, %s138
      %p140 = scmp.eq.s32.totalorder %s139, 0
      %s142 = sadd.s32 %s141, 1
      %s143 = scalar_select %p140, %s141, %s142
      %p146 = pneg %p140
      %p147 = scmp.eq.s32.totalorder %s13, 7
      %p148 = por %p146, %p147
      %p149 = scmp.ne.s32.totalorder %s141, %s144
      %p150 = scmp.eq.s32.totalorder %s13, 0
      %p151 = por %p149, %p150
      %p152 = scmp.ne.s32.totalorder %s141, %s144
      %p153 = scmp.eq.s32.totalorder %s18, 7
      %p154 = por %p152, %p153
      %p155 = scmp.ne.s32.totalorder %s144, %s145
      %p156 = scmp.eq.s32.totalorder %s18, 0
      %p157 = por %p155, %p156
      %p158 = scmp.ne.s32.totalorder %s144, %s145
      %p159 = scmp.eq.s32.totalorder %s19, 7
      %p160 = por %p158, %p159
      %p162 = scmp.ne.s32.totalorder %s145, %s161
      %p163 = scmp.eq.s32.totalorder %s19, 0
      %p164 = por %p162, %p163
      %p165 = scmp.le.s32.totalorder 1, %s13
      %p166 = scmp.lt.s32.totalorder %s13, 9
      %p167 = pnand %p165, %p166
      %p168 = pneg %p167
      // Predicated region
      $region9: #{tpu_custom_call.1} parent=5 // pred_check
        _
      $region10: #{tpu_custom_call.1} parent=5 // pred_check_branch
        %170 = sbr.rel (%p167) target = $region12
      $region11: #{tpu_custom_call.1} parent=5 // pred_region
        %s171 = ssub.s32 %s13, 1
      $region12: #{tpu_custom_call.1} parent=5 // pred_fallthru
        _
      %p172 = scmp.lt.s32.totalorder %s13, 8
      // Predicated region
      $region13: #{tpu_custom_call.1} parent=5 // pred_check
        %p173 = pneg %p172
      $region14: #{tpu_custom_call.1} parent=5 // pred_check_branch
        %175 = sbr.rel (%p173) target = $region16
      $region15: #{tpu_custom_call.1} parent=5 // pred_region
        // Predicated region
        $region17: #{tpu_custom_call.1} parent=15 // pred_check
          %p176 = pneg %p45
        $region18: #{tpu_custom_call.1} parent=15 // pred_check_branch
          %178 = sbr.rel (%p176) target = $region20
        $region19: #{tpu_custom_call.1} parent=15 // pred_region
          %p179 = scmp.lt.s32.totalorder %s20, 1
          %s180 = scalar_select %p179, %s20, 1
          %s181 = smul.addr %s180, 8
          %s182 = scalar_lea.vmem %s0, %s181
        $region20: #{tpu_custom_call.1} parent=15 // pred_fallthru
          _
        // Predicated region
        $region21: #{tpu_custom_call.1} parent=15 // pred_check
          %p183 = pneg %p71
        $region22: #{tpu_custom_call.1} parent=15 // pred_check_branch
          %185 = sbr.rel (%p183) target = $region24
        $region23: #{tpu_custom_call.1} parent=15 // pred_region
          %p186 = scmp.lt.s32.totalorder %s21, 3
          %s187 = scalar_select %p186, %s21, 3
          %s188 = smul.addr %s187, 4
          %s189 = smul.addr %s188, 8
          %s190 = scalar_lea.vmem %s1, %s189
        $region24: #{tpu_custom_call.1} parent=15 // pred_fallthru
          _
        // Predicated region
        $region25: #{tpu_custom_call.1} parent=15 // pred_check
          %p191 = pneg %p97
        $region26: #{tpu_custom_call.1} parent=15 // pred_check_branch
          %193 = sbr.rel (%p191) target = $region28
        $region27: #{tpu_custom_call.1} parent=15 // pred_region
          %p194 = scmp.lt.s32.totalorder %s21, 3
          %s195 = scalar_select %p194, %s21, 3
          %s196 = smul.addr %s195, 4
          %s197 = smul.addr %s196, 8
          %s198 = scalar_lea.vmem %s2, %s197
        $region28: #{tpu_custom_call.1} parent=15 // pred_fallthru
          _
        // Predicated region
        $region29: #{tpu_custom_call.1} parent=15 // pred_check
          %p199 = pneg %p123
        $region30: #{tpu_custom_call.1} parent=15 // pred_check_branch
          %201 = sbr.rel (%p199) target = $region32
        $region31: #{tpu_custom_call.1} parent=15 // pred_region
          %p202 = scmp.lt.s32.totalorder %s21, 3
          %s203 = scalar_select %p202, %s21, 3
          %s204 = smul.addr %s203, 4
          %s205 = smul.addr %s204, 8
          %s206 = scalar_lea.vmem %s3, %s205
        $region32: #{tpu_custom_call.1} parent=15 // pred_fallthru
          _
      $region16: #{tpu_custom_call.1} parent=5 // pred_fallthru
        _
      %p207 = scmp.le.s32.totalorder 1, %s13
      %p208 = scmp.lt.s32.totalorder %s13, 9
      %p209 = pnand %p207, %p208
      %p210 = pneg %p209
      // Predicated region
      $region33: #{tpu_custom_call.1} parent=5 // pred_check
        _
      $region34: #{tpu_custom_call.1} parent=5 // pred_check_branch
        %212 = sbr.rel (%p209) target = $region36
      $region35: #{tpu_custom_call.1} parent=5 // pred_region
        %s213 = ssub.s32 %s13, 1
        %p214 = scmp.lt.s32.totalorder %s22, 1
        %s215 = scalar_select %p214, %s22, 1
        %s216 = smul.addr %s215, 8
        %s217 = scalar_lea.vmem %s0, %s216
        %p218 = pneg %p51
        %p219 = pneg %p48
        %p220 = scmp.lt.s32.totalorder %s23, 3
        %s221 = scalar_select %p220, %s23, 3
        %s222 = smul.addr %s221, 4
        %s223 = smul.addr %s222, 8
        %s224 = scalar_lea.vmem %s1, %s223
        %p225 = pneg %p77
        %p226 = pneg %p74
        %p227 = scmp.lt.s32.totalorder %s23, 3
        %s228 = scalar_select %p227, %s23, 3
        %s229 = smul.addr %s228, 4
        %s230 = smul.addr %s229, 8
        %s231 = scalar_lea.vmem %s2, %s230
        %p232 = pneg %p103
        %p233 = pneg %p100
        %p234 = scmp.lt.s32.totalorder %s23, 3
        %s235 = scalar_select %p234, %s23, 3
        %s236 = smul.addr %s235, 4
        %s237 = smul.addr %s236, 8
        %s238 = scalar_lea.vmem %s3, %s237
        %p239 = pneg %p129
        %p240 = pneg %p126
        %p241 = pneg %p157
        %p242 = pneg %p154
        %s243 = sand.u32 %s144, 1
        %s244 = scalar_lea.sflag [#allocation3], %s243
        %s245 = sand.u32 %s144, 1
        %s246 = smul.addr %s245, 8
        %s247 = scalar_lea.vmem [#allocation2], %s246
        %p248 = scmp.lt.s32.totalorder %s22, 1
        %s249 = scalar_select %p248, %s22, 1
        %s250 = smul.addr %s249, 8
        %s251 = scalar_lea.vmem %s0, %s250
        %p252 = scmp.lt.s32.totalorder %s23, 3
        %s253 = scalar_select %p252, %s23, 3
        %s254 = smul.addr %s253, 4
        %s255 = smul.addr %s254, 8
        %s256 = scalar_lea.vmem %s1, %s255
        %p257 = scmp.lt.s32.totalorder %s23, 3
        %s258 = scalar_select %p257, %s23, 3
        %s259 = smul.addr %s258, 4
        %s260 = smul.addr %s259, 8
        %s261 = scalar_lea.vmem %s2, %s260
        %p262 = scmp.lt.s32.totalorder %s23, 3
        %s263 = scalar_select %p262, %s23, 3
        %s264 = smul.addr %s263, 4
        %s265 = smul.addr %s264, 8
        %s266 = scalar_lea.vmem %s3, %s265
        %v267 = vld [vmem:[%s251] sm:$0xff]
        %v268 = vld [vmem:[%s256] sm:$0xff]
        %v269 = vld [vmem:[%s256 + $0x8] sm:$0xff]
        %v270 = vld [vmem:[%s256 + $0x10] sm:$0xff]
        %v271 = vld [vmem:[%s256 + $0x18] sm:$0xff]
        %vm272 = vcmask 261120
        %v274 = vsel %vm272, %v267, 0
        %276 = vmatprep.subr.mxu0 0.0
        %277 = vmatpush1.msra.mxu0 0.0
        %278 = vmatprep.subr.mxu0 0.0
        %279 = vmatpush1.msra.mxu0 0.0
        %280 = vmatprep.subr.mxu0 0.0
        %281 = vmatpush1.msra.mxu0 0.0
        %282 = vmatprep.subr.mxu0 0.0
        %283 = vmatpush1.msra.mxu0 0.0
        %284 = vmatprep.subr.mxu0 0.0
        %285 = vmatpush1.msra.mxu0 0.0
        %286 = vmatprep.subr.mxu0 0.0
        %287 = vmatpush1.msra.mxu0 0.0
        %288 = vmatprep.subr.mxu0 0.0
        %289 = vmatpush1.msra.mxu0 0.0
        %290 = vmatprep.subr.mxu0 0.0
        %291 = vmatpush1.msra.mxu0 0.0
        %292 = vmatprep.subr.mxu0 0.0
        %293 = vmatpush1.msra.mxu0 0.0
        %294 = vmatprep.subr.mxu0 0.0
        %295 = vmatpush1.msra.mxu0 0.0
        %296 = vmatprep.subr.mxu0 0.0
        %297 = vmatpush1.msra.mxu0 0.0
        %298 = vmatprep.subr.mxu0 0.0
        %299 = vmatpush1.msra.mxu0 0.0
        %300 = vmatprep.subr.mxu0 0.0
        %301 = vmatpush1.msra.mxu0 %v271
        %302 = vmatprep.subr.mxu0 0.0
        %303 = vmatpush1.msra.mxu0 %v270
        %304 = vmatprep.subr.mxu0 0.0
        %305 = vmatpush1.msra.mxu0 %v269
        %306 = vmatprep.subr.mxu0 0.0
        %307 = vmatpush1.msra.mxu0 %v268
        %308 = vmatprep.subr.mxu0 0.0
        %309 = vmatpush2.msra.mxu0 0.0
        %310 = vmatprep.subr.mxu0 0.0
        %311 = vmatpush2.msra.mxu0 0.0
        %312 = vmatprep.subr.mxu0 0.0
        %313 = vmatpush2.msra.mxu0 0.0
        %314 = vmatprep.subr.mxu0 0.0
        %315 = vmatpush2.msra.mxu0 0.0
        %316 = vmatprep.subr.mxu0 0.0
        %317 = vmatpush2.msra.mxu0 0.0
        %318 = vmatprep.subr.mxu0 0.0
        %319 = vmatpush2.msra.mxu0 0.0
        %320 = vmatprep.subr.mxu0 0.0
        %321 = vmatpush2.msra.mxu0 0.0
        %322 = vmatprep.subr.mxu0 0.0
        %323 = vmatpush2.msra.mxu0 0.0
        %324 = vmatprep.subr.mxu0 0.0
        %325 = vmatpush2.msra.mxu0 0.0
        %326 = vmatprep.subr.mxu0 0.0
        %327 = vmatpush2.msra.mxu0 0.0
        %328 = vmatprep.subr.mxu0 0.0
        %329 = vmatpush2.msra.mxu0 0.0
        %330 = vmatprep.subr.mxu0 0.0
        %331 = vmatpush2.msra.mxu0 0.0
        %332 = vmatprep.subr.mxu0 0.0
        %333 = vmatpush2.msra.mxu0 0.0
        %334 = vmatprep.subr.mxu0 0.0
        %335 = vmatpush2.msra.mxu0 0.0
        %336 = vmatprep.subr.mxu0 0.0
        %337 = vmatpush2.msra.mxu0 0.0
        %338 = vmatprep.subr.mxu0 0.0
        %339 = vmatpush2.msra.mxu0 0.0
        %340 = vmatprep.mubr.f32.mxu0 0.0
        %341 = vmatmul.mubr.f32.gmra.mxu0 %v274
        %v342 = vpop.f32.mrf.mxu0
        %v343 = vadd.f32 0.0, %v342
        %v344 = vpop.f32.mrf.mxu0
        %345 = vdwg.mxu0
        %v346 = vld [vmem:[%s261] sm:$0xff]
        %v347 = vld [vmem:[%s261 + $0x8] sm:$0xff]
        %v348 = vld [vmem:[%s261 + $0x10] sm:$0xff]
        %v349 = vld [vmem:[%s261 + $0x18] sm:$0xff]
        %350 = vmatprep.subr.mxu0 0.0
        %351 = vmatpush1.msra.mxu0 0.0
        %352 = vmatprep.subr.mxu0 0.0
        %353 = vmatpush1.msra.mxu0 0.0
        %354 = vmatprep.subr.mxu0 0.0
        %355 = vmatpush1.msra.mxu0 0.0
        %356 = vmatprep.subr.mxu0 0.0
        %357 = vmatpush1.msra.mxu0 0.0
        %358 = vmatprep.subr.mxu0 0.0
        %359 = vmatpush1.msra.mxu0 0.0
        %360 = vmatprep.subr.mxu0 0.0
        %361 = vmatpush1.msra.mxu0 0.0
        %362 = vmatprep.subr.mxu0 0.0
        %363 = vmatpush1.msra.mxu0 0.0
        %364 = vmatprep.subr.mxu0 0.0
        %365 = vmatpush1.msra.mxu0 0.0
        %366 = vmatprep.subr.mxu0 0.0
        %367 = vmatpush1.msra.mxu0 0.0
        %368 = vmatprep.subr.mxu0 0.0
        %369 = vmatpush1.msra.mxu0 0.0
        %370 = vmatprep.subr.mxu0 0.0
        %371 = vmatpush1.msra.mxu0 0.0
        %372 = vmatprep.subr.mxu0 0.0
        %373 = vmatpush1.msra.mxu0 0.0
        %374 = vmatprep.subr.mxu0 0.0
        %375 = vmatpush1.msra.mxu0 %v349
        %376 = vmatprep.subr.mxu0 0.0
        %377 = vmatpush1.msra.mxu0 %v348
        %378 = vmatprep.subr.mxu0 0.0
        %379 = vmatpush1.msra.mxu0 %v347
        %380 = vmatprep.subr.mxu0 0.0
        %381 = vmatpush1.msra.mxu0 %v346
        %382 = vmatprep.subr.mxu0 0.0
        %383 = vmatpush2.msra.mxu0 0.0
        %384 = vmatprep.subr.mxu0 0.0
        %385 = vmatpush2.msra.mxu0 0.0
        %386 = vmatprep.subr.mxu0 0.0
        %387 = vmatpush2.msra.mxu0 0.0
        %388 = vmatprep.subr.mxu0 0.0
        %389 = vmatpush2.msra.mxu0 0.0
        %390 = vmatprep.subr.mxu0 0.0
        %391 = vmatpush2.msra.mxu0 0.0
        %392 = vmatprep.subr.mxu0 0.0
        %393 = vmatpush2.msra.mxu0 0.0
        %394 = vmatprep.subr.mxu0 0.0
        %395 = vmatpush2.msra.mxu0 0.0
        %396 = vmatprep.subr.mxu0 0.0
        %397 = vmatpush2.msra.mxu0 0.0
        %398 = vmatprep.subr.mxu0 0.0
        %399 = vmatpush2.msra.mxu0 0.0
        %400 = vmatprep.subr.mxu0 0.0
        %401 = vmatpush2.msra.mxu0 0.0
        %402 = vmatprep.subr.mxu0 0.0
        %403 = vmatpush2.msra.mxu0 0.0
        %404 = vmatprep.subr.mxu0 0.0
        %405 = vmatpush2.msra.mxu0 0.0
        %406 = vmatprep.subr.mxu0 0.0
        %407 = vmatpush2.msra.mxu0 0.0
        %408 = vmatprep.subr.mxu0 0.0
        %409 = vmatpush2.msra.mxu0 0.0
        %410 = vmatprep.subr.mxu0 0.0
        %411 = vmatpush2.msra.mxu0 0.0
        %412 = vmatprep.subr.mxu0 0.0
        %413 = vmatpush2.msra.mxu0 0.0
        %414 = vmatprep.mubr.f32.mxu0 0.0
        %415 = vmatmul.mubr.f32.gmra.mxu0 %v274
        %v416 = vpop.f32.mrf.mxu0
        %v417 = vadd.f32 0.0, %v416
        %v418 = vpop.f32.mrf.mxu0
        %419 = vdwg.mxu0
        %v420 = vld [vmem:[%s266] sm:$0xff]
        %v421 = vld [vmem:[%s266 + $0x8] sm:$0xff]
        %v422 = vld [vmem:[%s266 + $0x10] sm:$0xff]
        %v423 = vld [vmem:[%s266 + $0x18] sm:$0xff]
        %424 = vmatprep.subr.mxu0 0.0
        %425 = vmatpush1.msra.mxu0 0.0
        %426 = vmatprep.subr.mxu0 0.0
        %427 = vmatpush1.msra.mxu0 0.0
        %428 = vmatprep.subr.mxu0 0.0
        %429 = vmatpush1.msra.mxu0 0.0
        %430 = vmatprep.subr.mxu0 0.0
        %431 = vmatpush1.msra.mxu0 0.0
        %432 = vmatprep.subr.mxu0 0.0
        %433 = vmatpush1.msra.mxu0 0.0
        %434 = vmatprep.subr.mxu0 0.0
        %435 = vmatpush1.msra.mxu0 0.0
        %436 = vmatprep.subr.mxu0 0.0
        %437 = vmatpush1.msra.mxu0 0.0
        %438 = vmatprep.subr.mxu0 0.0
        %439 = vmatpush1.msra.mxu0 0.0
        %440 = vmatprep.subr.mxu0 0.0
        %441 = vmatpush1.msra.mxu0 0.0
        %442 = vmatprep.subr.mxu0 0.0
        %443 = vmatpush1.msra.mxu0 0.0
        %444 = vmatprep.subr.mxu0 0.0
        %445 = vmatpush1.msra.mxu0 0.0
        %446 = vmatprep.subr.mxu0 0.0
        %447 = vmatpush1.msra.mxu0 0.0
        %448 = vmatprep.subr.mxu0 0.0
        %449 = vmatpush1.msra.mxu0 %v423
        %450 = vmatprep.subr.mxu0 0.0
        %451 = vmatpush1.msra.mxu0 %v422
        %452 = vmatprep.subr.mxu0 0.0
        %453 = vmatpush1.msra.mxu0 %v421
        %454 = vmatprep.subr.mxu0 0.0
        %455 = vmatpush1.msra.mxu0 %v420
        %456 = vmatprep.subr.mxu0 0.0
        %457 = vmatpush2.msra.mxu0 0.0
        %458 = vmatprep.subr.mxu0 0.0
        %459 = vmatpush2.msra.mxu0 0.0
        %460 = vmatprep.subr.mxu0 0.0
        %461 = vmatpush2.msra.mxu0 0.0
        %462 = vmatprep.subr.mxu0 0.0
        %463 = vmatpush2.msra.mxu0 0.0
        %464 = vmatprep.subr.mxu0 0.0
        %465 = vmatpush2.msra.mxu0 0.0
        %466 = vmatprep.subr.mxu0 0.0
        %467 = vmatpush2.msra.mxu0 0.0
        %468 = vmatprep.subr.mxu0 0.0
        %469 = vmatpush2.msra.mxu0 0.0
        %470 = vmatprep.subr.mxu0 0.0
        %471 = vmatpush2.msra.mxu0 0.0
        %472 = vmatprep.subr.mxu0 0.0
        %473 = vmatpush2.msra.mxu0 0.0
        %474 = vmatprep.subr.mxu0 0.0
        %475 = vmatpush2.msra.mxu0 0.0
        %476 = vmatprep.subr.mxu0 0.0
        %477 = vmatpush2.msra.mxu0 0.0
        %478 = vmatprep.subr.mxu0 0.0
        %479 = vmatpush2.msra.mxu0 0.0
        %480 = vmatprep.subr.mxu0 0.0
        %481 = vmatpush2.msra.mxu0 0.0
        %482 = vmatprep.subr.mxu0 0.0
        %483 = vmatpush2.msra.mxu0 0.0
        %484 = vmatprep.subr.mxu0 0.0
        %485 = vmatpush2.msra.mxu0 0.0
        %486 = vmatprep.subr.mxu0 0.0
        %487 = vmatpush2.msra.mxu0 0.0
        %488 = vmatprep.mubr.f32.mxu0 0.0
        %489 = vmatmul.mubr.f32.gmra.mxu0 %v274
        %v490 = vpop.f32.mrf.mxu0
        %v491 = vadd.f32 0.0, %v490
        %v492 = vpop.f32.mrf.mxu0
        %493 = vdwg.mxu0
        %vm494 = vcmask 64512
        %v496 = vsel %vm494, %v343, 0
        %v499 = vsel %vm494, %v417, 0
        %501 = vmatprep.subr.mxu0 0.0
        %502 = vmatpush1.xpose.msra.mxu0 0.0
        %503 = vmatprep.subr.mxu0 0.0
        %504 = vmatpush1.xpose.msra.mxu0 0.0
        %505 = vmatprep.subr.mxu0 0.0
        %506 = vmatpush1.xpose.msra.mxu0 0.0
        %507 = vmatprep.subr.mxu0 0.0
        %508 = vmatpush1.xpose.msra.mxu0 0.0
        %509 = vmatprep.subr.mxu0 0.0
        %510 = vmatpush1.xpose.msra.mxu0 0.0
        %511 = vmatprep.subr.mxu0 0.0
        %512 = vmatpush1.xpose.msra.mxu0 0.0
        %513 = vmatprep.subr.mxu0 0.0
        %514 = vmatpush1.xpose.msra.mxu0 0.0
        %515 = vmatprep.subr.mxu0 0.0
        %516 = vmatpush1.xpose.msra.mxu0 0.0
        %517 = vmatprep.subr.mxu0 0.0
        %518 = vmatpush1.xpose.msra.mxu0 0.0
        %519 = vmatprep.subr.mxu0 0.0
        %520 = vmatpush1.xpose.msra.mxu0 0.0
        %521 = vmatprep.subr.mxu0 0.0
        %522 = vmatpush1.xpose.msra.mxu0 0.0
        %523 = vmatprep.subr.mxu0 0.0
        %524 = vmatpush1.xpose.msra.mxu0 0.0
        %525 = vmatprep.subr.mxu0 0.0
        %526 = vmatpush1.xpose.msra.mxu0 0.0
        %527 = vmatprep.subr.mxu0 0.0
        %528 = vmatpush1.xpose.msra.mxu0 0.0
        %529 = vmatprep.subr.mxu0 0.0
        %530 = vmatpush1.xpose.msra.mxu0 0.0
        %531 = vmatprep.subr.mxu0 0.0
        %532 = vmatpush1.xpose.msra.mxu0 %v499
        %533 = vmatprep.subr.mxu0 0.0
        %534 = vmatpush2.xpose.msra.mxu0 0.0
        %535 = vmatprep.subr.mxu0 0.0
        %536 = vmatpush2.xpose.msra.mxu0 0.0
        %537 = vmatprep.subr.mxu0 0.0
        %538 = vmatpush2.xpose.msra.mxu0 0.0
        %539 = vmatprep.subr.mxu0 0.0
        %540 = vmatpush2.xpose.msra.mxu0 0.0
        %541 = vmatprep.subr.mxu0 0.0
        %542 = vmatpush2.xpose.msra.mxu0 0.0
        %543 = vmatprep.subr.mxu0 0.0
        %544 = vmatpush2.xpose.msra.mxu0 0.0
        %545 = vmatprep.subr.mxu0 0.0
        %546 = vmatpush2.xpose.msra.mxu0 0.0
        %547 = vmatprep.subr.mxu0 0.0
        %548 = vmatpush2.xpose.msra.mxu0 0.0
        %549 = vmatprep.subr.mxu0 0.0
        %550 = vmatpush2.xpose.msra.mxu0 0.0
        %551 = vmatprep.subr.mxu0 0.0
        %552 = vmatpush2.xpose.msra.mxu0 0.0
        %553 = vmatprep.subr.mxu0 0.0
        %554 = vmatpush2.xpose.msra.mxu0 0.0
        %555 = vmatprep.subr.mxu0 0.0
        %556 = vmatpush2.xpose.msra.mxu0 0.0
        %557 = vmatprep.subr.mxu0 0.0
        %558 = vmatpush2.xpose.msra.mxu0 0.0
        %559 = vmatprep.subr.mxu0 0.0
        %560 = vmatpush2.xpose.msra.mxu0 0.0
        %561 = vmatprep.subr.mxu0 0.0
        %562 = vmatpush2.xpose.msra.mxu0 0.0
        %563 = vmatprep.subr.mxu0 0.0
        %564 = vmatpush2.xpose.msra.mxu0 0.0
        %565 = vmatprep.mubr.f32.mxu0 0.0
        %566 = vmatmul.mubr.f32.gmra.mxu0 %v496
        %v567 = vpop.f32.mrf.mxu0
        %v568 = vadd.f32 0.0, %v567
        %v569 = vpop.f32.mrf.mxu0
        %570 = vdwg.mxu0
        %v571 = vmul.f32 %v568, 0.35355338
        %v572 = vlaneseq
        %v573 = vshrl.u32 %v572, 7
        %v574 = vlaneseq
        %v575 = vand.u32 %v574, 127
        %vm576 = vcmp.le.s32.totalorder %v575, %v573
        %v577 = vsel %vm576, 0.0, -1e+10
        %v578 = vadd.f32 %v571, %v577
        %v579 = vsel %vm494, %v578, -inf
        %580 = vmax.xlane.f32.xlu0 %v579
        %v581 = vpop.xlane.xlu0 %580
        %v582 = vsub.f32 %v578, %v581
        %v583 = vmul.f32 %v582, 1.442695
        %v584 = vpow.pop %v583
        %v585 = vsel %vm494, %v584, 0.0
        %586 = vadd.xlane.f32.xlu0 %v585
        %v587 = vpop.xlane.xlu0 %586
        %v588 = vrcp.pop %v587
        %v589 = vmul.f32 %v584, %v588
        %v591 = vsel %vm494, %v589, 0
        %593 = vmatprep.subr.mxu0 0.0
        %594 = vmatpush1.msra.mxu0 0.0
        %595 = vmatprep.subr.mxu0 0.0
        %596 = vmatpush1.msra.mxu0 0.0
        %597 = vmatprep.subr.mxu0 0.0
        %598 = vmatpush1.msra.mxu0 0.0
        %599 = vmatprep.subr.mxu0 0.0
        %600 = vmatpush1.msra.mxu0 0.0
        %601 = vmatprep.subr.mxu0 0.0
        %602 = vmatpush1.msra.mxu0 0.0
        %603 = vmatprep.subr.mxu0 0.0
        %604 = vmatpush1.msra.mxu0 0.0
        %605 = vmatprep.subr.mxu0 0.0
        %606 = vmatpush1.msra.mxu0 0.0
        %607 = vmatprep.subr.mxu0 0.0
        %608 = vmatpush1.msra.mxu0 0.0
        %609 = vmatprep.subr.mxu0 0.0
        %610 = vmatpush1.msra.mxu0 0.0
        %611 = vmatprep.subr.mxu0 0.0
        %612 = vmatpush1.msra.mxu0 0.0
        %613 = vmatprep.subr.mxu0 0.0
        %614 = vmatpush1.msra.mxu0 0.0
        %615 = vmatprep.subr.mxu0 0.0
        %616 = vmatpush1.msra.mxu0 0.0
        %617 = vmatprep.subr.mxu0 0.0
        %618 = vmatpush1.msra.mxu0 0.0
        %619 = vmatprep.subr.mxu0 0.0
        %620 = vmatpush1.msra.mxu0 0.0
        %621 = vmatprep.subr.mxu0 0.0
        %622 = vmatpush1.msra.mxu0 0.0
        %623 = vmatprep.subr.mxu0 0.0
        %624 = vmatpush1.msra.mxu0 %v491
        %625 = vmatprep.subr.mxu0 0.0
        %626 = vmatpush2.msra.mxu0 0.0
        %627 = vmatprep.subr.mxu0 0.0
        %628 = vmatpush2.msra.mxu0 0.0
        %629 = vmatprep.subr.mxu0 0.0
        %630 = vmatpush2.msra.mxu0 0.0
        %631 = vmatprep.subr.mxu0 0.0
        %632 = vmatpush2.msra.mxu0 0.0
        %633 = vmatprep.subr.mxu0 0.0
        %634 = vmatpush2.msra.mxu0 0.0
        %635 = vmatprep.subr.mxu0 0.0
        %636 = vmatpush2.msra.mxu0 0.0
        %637 = vmatprep.subr.mxu0 0.0
        %638 = vmatpush2.msra.mxu0 0.0
        %639 = vmatprep.subr.mxu0 0.0
        %640 = vmatpush2.msra.mxu0 0.0
        %641 = vmatprep.subr.mxu0 0.0
        %642 = vmatpush2.msra.mxu0 0.0
        %643 = vmatprep.subr.mxu0 0.0
        %644 = vmatpush2.msra.mxu0 0.0
        %645 = vmatprep.subr.mxu0 0.0
        %646 = vmatpush2.msra.mxu0 0.0
        %647 = vmatprep.subr.mxu0 0.0
        %648 = vmatpush2.msra.mxu0 0.0
        %649 = vmatprep.subr.mxu0 0.0
        %650 = vmatpush2.msra.mxu0 0.0
        %651 = vmatprep.subr.mxu0 0.0
        %652 = vmatpush2.msra.mxu0 0.0
        %653 = vmatprep.subr.mxu0 0.0
        %654 = vmatpush2.msra.mxu0 0.0
        %655 = vmatprep.subr.mxu0 0.0
        %656 = vmatpush2.msra.mxu0 0.0
        %657 = vmatprep.mubr.f32.mxu0 0.0
        %658 = vmatmul.mubr.f32.gmra.mxu0 %v591
        %v659 = vpop.f32.mrf.mxu0
        %v660 = vadd.f32 0.0, %v659
        %v661 = vpop.f32.mrf.mxu0
        %662 = vdwg.mxu0
        %663 = vst.msk [vmem:[%s247] sm:$0xff] %vm494, %v660
        %s664 = sand.u32 %s144, 1
        %s665 = scalar_lea.sflag [#allocation3], %s664
        %s666 = sand.u32 %s144, 1
        %s667 = smul.addr %s666, 8
        %s668 = scalar_lea.vmem [#allocation2], %s667
        // Predicated region
        $region37: #{tpu_custom_call.1} parent=35 // pred_check
          %p669 = pneg %p154
        $region38: #{tpu_custom_call.1} parent=35 // pred_check_branch
          %671 = sbr.rel (%p669) target = $region40
        $region39: #{tpu_custom_call.1} parent=35 // pred_region
          %s673 = ssub.s32 128, 128
          %674 = vsyncadd %s665, %s673
          %s675 = smul.addr %s22, 4
          %s676 = sadd.s32 %s23, %s675
          %s677 = smul.addr %s676, 128
          %s678 = scalar_lea.hbm %s4, %s677
          %s680 = sshll.u32 %s668, 4
          %s681 = int_to_ptr.vmem [resolvable:$true] %s680
          %683 = dma.vmem_to_hbm [thread:$0]  %s681, 128, %s678, %s665
        $region40: #{tpu_custom_call.1} parent=35 // pred_fallthru
          _
      $region36: #{tpu_custom_call.1} parent=5 // pred_fallthru
        _
      %p684 = scmp.le.s32.totalorder 2, %s13
      // Predicated region
      $region41: #{tpu_custom_call.1} parent=5 // pred_check
        %p685 = pneg %p684
      $region42: #{tpu_custom_call.1} parent=5 // pred_check_branch
        %687 = sbr.rel (%p685) target = $region44
      $region43: #{tpu_custom_call.1} parent=5 // pred_region
        %s688 = ssub.s32 %s13, 2
        // Predicated region
        $region45: #{tpu_custom_call.1} parent=43 // pred_check
          %p689 = pneg %p160
        $region46: #{tpu_custom_call.1} parent=43 // pred_check_branch
          %691 = sbr.rel (%p689) target = $region48
        $region47: #{tpu_custom_call.1} parent=43 // pred_region
          %s692 = sand.u32 %s145, 1
          %s693 = scalar_lea.sflag [#allocation3], %s692
          %s694 = sand.u32 %s145, 1
          %s695 = smul.addr %s694, 8
          %s696 = scalar_lea.vmem [#allocation2], %s695
          %697 = dma.done %s693, 128
        $region48: #{tpu_custom_call.1} parent=43 // pred_fallthru
          _
      $region44: #{tpu_custom_call.1} parent=5 // pred_fallthru
        _
    $region6: #{tpu_custom_call.1} parent=1 // loop_footer
      %s17 = sadd.s32 1, %s13
    $region7: #{tpu_custom_call.1} parent=1 // loop_footer_branch
      %12 = sbr.rel target = $region3
    $region8: #{tpu_custom_call.1} parent=1 // loop_exit
      _
    %698 = vsyncpa [#allocation3], 1
    %s699 = scalar_lea.sflag [#allocation3], 1
    %700 = vsyncpa %s699, 1

</llo_original>
